<compile_context>
chip_gen: v5e
topology: v5e:2x2
jax: 0.10.0
libtpu: 0.0.40
codegen_flags: <defaults>
</compile_context>

<pallas_src>
import functools

import jax
import jax.numpy as jnp
import numpy as np
from jax.experimental import pallas as pl
from jax.experimental.pallas import tpu as pltpu


def _round_up(x: int, m: int) -> int:
    return ((x + m - 1) // m) * m


def _pick_hidden_block(dh: int) -> int:
    """Hidden-column chunk width for the in-kernel loop (multiple of 128)."""
    if dh <= 512:
        return dh
    for hb in (512, 256, 128):
        if dh % hb == 0:
            return hb
    return dh


def _mish_from_exp(h):
    # mish(h) = h * tanh(softplus(h)) = h * ((1+e^h)^2 - 1) / ((1+e^h)^2 + 1)
    # 1 EUP exp + near-free approx reciprocal instead of exp/log1p/tanh.
    # Clamp the exp argument: for h >= 20 the ratio is 1.0 in f32, so the
    # clamped form already returns h (the correct saturation).
    t = 1.0 + jnp.exp(jnp.minimum(h, 20.0))
    s = t * t
    return h * ((s - 1.0) * pl.reciprocal(s + 1.0, approx=True))


def _mlp_kernel(x_ref,    # (TN, D)  input tile (caller dtype)
                w1_ref,   # (D, DH)  inner weight [in, out], bf16, resident
                b1_ref,   # (1, DH)  inner bias, f32, resident
                w2_ref,   # (DH, O)  outer weight [in, out], bf16, resident
                b2_ref,   # (1, O)   outer bias, f32, resident
                out_ref,  # (TN, O)  output tile (caller dtype)
                *, hidden_block: int):
    x = x_ref[...].astype(jnp.bfloat16)          # bf16 operands for the MXU
    dh = w1_ref.shape[1]
    hb = hidden_block
    nblk = dh // hb

    def hidden_step(off, acc):
        w1_blk = w1_ref[:, pl.ds(off, hb)]
        b1_blk = b1_ref[:, pl.ds(off, hb)]
        h = jnp.dot(x, w1_blk, preferred_element_type=jnp.float32) + b1_blk
        m = _mish_from_exp(h).astype(jnp.bfloat16)
        return acc + jnp.dot(m, w2_ref[pl.ds(off, hb), :],
                             preferred_element_type=jnp.float32)

    if nblk == 1:
        acc = hidden_step(0, jnp.zeros(out_ref.shape, jnp.float32))
    else:
        # Chunk the hidden columns so the (TN, DH) f32 intermediate never
        # materializes at once (bounds vreg pressure / spill traffic).
        def body(j, acc):
            off = pl.multiple_of(j * hb, hb)
            return hidden_step(off, acc)
        acc = jax.lax.fori_loop(0, nblk, body,
                                jnp.zeros(out_ref.shape, jnp.float32))

    out_ref[...] = (acc + b2_ref[...]).astype(out_ref.dtype)


def prepare_mlp_params(w1, b1, w2, b2):
    """Pad the hidden dim to a lane multiple and cast to bf16/f32 ONCE.

    w1: (D, D)  stored [in, out]  (== inner.weight.T)
    b1: (D,)
    w2: (D, O)  stored [in, out]  (== outer.weight.T)
    b2: (O,)
    Padding is exact: padded hidden columns get weight 0 and bias 0, and
    mish(0) == 0, so they contribute nothing to the output.
    """
    D = w1.shape[0]
    O = w2.shape[1]
    DH = _round_up(D, 128)                       # lane-dense hidden dim
    w1p = jnp.zeros((D, DH), jnp.bfloat16).at[:, :D].set(w1.astype(jnp.bfloat16))
    b1p = jnp.zeros((1, DH), jnp.float32).at[0, :D].set(
        b1.reshape(-1).astype(jnp.float32))
    w2p = jnp.zeros((DH, O), jnp.bfloat16).at[:D, :].set(w2.astype(jnp.bfloat16))
    b2p = b2.reshape(1, O).astype(jnp.float32)
    return w1p, b1p, w2p, b2p


@functools.partial(jax.jit, static_argnames=("block_rows",))
def mlp_forward(x, w1p, b1p, w2p, b2p, *, block_rows: int = 512):
    """MLP forward: outer(mish(inner(x))). Returns (N, O) in x.dtype."""
    N, D = x.shape
    DH = w1p.shape[1]
    O = w2p.shape[1]

    if N <= block_rows:
        tn = N                      # single tile; full-dim block is legal
    else:
        tn = _round_up(block_rows, 8)
    grid = (pl.cdiv(N, tn),)        # ragged final tile handled by Pallas

    # VMEM budget: 2x double-buffered x/out tiles + single-buffered weights.
    itemsize = x.dtype.itemsize
    need = (2 * tn * D * itemsize + 2 * tn * O * itemsize
            + (D * DH + DH * O) * 2 + (DH + O) * 4)
    vmem_limit = min(64 * 1024 * 1024,
                     max(32 * 1024 * 1024, int(1.5 * need)))

    kernel = functools.partial(_mlp_kernel,
                               hidden_block=_pick_hidden_block(DH))

    return pl.pallas_call(
        kernel,
        out_shape=jax.ShapeDtypeStruct((N, O), x.dtype),
        grid_spec=pltpu.PrefetchScalarGridSpec(
            num_scalar_prefetch=0,
            grid=grid,
            in_specs=[
                # x tile: pipelined (double-buffered) along the row grid axis.
                pl.BlockSpec((tn, D), lambda i: (i, 0)),
                # Resident weights/biases: constant index_map, single buffer.
                pl.BlockSpec((D, DH), lambda i: (0, 0),
                             pipeline_mode=pl.Buffered(1)),
                pl.BlockSpec((1, DH), lambda i: (0, 0),
                             pipeline_mode=pl.Buffered(1)),
                pl.BlockSpec((DH, O), lambda i: (0, 0),
                             pipeline_mode=pl.Buffered(1)),
                pl.BlockSpec((1, O), lambda i: (0, 0),
                             pipeline_mode=pl.Buffered(1)),
            ],
            out_specs=pl.BlockSpec((tn, O), lambda i: (i, 0)),
        ),
        compiler_params=pltpu.CompilerParams(
            dimension_semantics=("parallel",),
            vmem_limit_bytes=vmem_limit,
        ),
    )(x, w1p, b1p, w2p, b2p)


def _reference(x, w1, b1, w2, b2):
    h = x @ w1 + b1.reshape(1, -1)
    m = h * jnp.tanh(jax.nn.softplus(h))
    return m @ w2 + b2.reshape(1, -1)


if __name__ == "__main__":
    D = 32    # input_size
    O = 16    # output_size
    N = 16    # rows of the input batch

    key = jax.random.PRNGKey(0)
    k_x, k_w1, k_b1, k_w2, k_b2 = jax.random.split(key, 5)
    x = jax.random.normal(k_x, (N, D), dtype=jnp.float32)
    # Parameters stored as [in, out] / [out] (i.e. PyTorch weight transposed).
    w1 = jax.random.normal(k_w1, (D, D), dtype=jnp.float32) * 0.1
    b1 = jax.random.normal(k_b1, (D,), dtype=jnp.float32) * 0.1
    w2 = jax.random.normal(k_w2, (D, O), dtype=jnp.float32) * 0.1
    b2 = jax.random.normal(k_b2, (O,), dtype=jnp.float32) * 0.1

    params = prepare_mlp_params(w1, b1, w2, b2)   # pad + cast once
    out = mlp_forward(x, *params)
    out = jax.block_until_ready(out)

    ref = _reference(x, w1, b1, w2, b2)
    # bf16 MXU operands -> relaxed tolerance (f32 accumulation kept).
    np.testing.assert_allclose(np.asarray(out), np.asarray(ref),
                               rtol=2e-2, atol=2e-2)
    print("KERNEL_OK")
</pallas_src>

<mosaic_0001>
module attributes {stable_mosaic.version = 11 : i64} {
  func.func @_mlp_kernel(%arg0: i32, %arg1: memref<16x32xf32, #tpu.memory_space<vmem>>, %arg2: memref<32x128xbf16, #tpu.memory_space<vmem>>, %arg3: memref<1x128xf32, #tpu.memory_space<vmem>>, %arg4: memref<128x16xbf16, #tpu.memory_space<vmem>>, %arg5: memref<1x16xf32, #tpu.memory_space<vmem>>, %arg6: memref<16x16xf32, #tpu.memory_space<vmem>>) attributes {dimension_semantics = [#tpu.dimension_semantics<parallel>], iteration_bounds = array<i64: 1>, scalar_prefetch = 0 : i64, scratch_operands = 0 : i64, tpu.core_type = #tpu.core_type<tc>, window_params = [{transform_indices = @transform_0, window_bounds = array<i64: 16, 32>}, {pipeline_mode = #tpu.pipeline_mode<synchronous>, transform_indices = @transform_1, window_bounds = array<i64: 32, 128>}, {pipeline_mode = #tpu.pipeline_mode<synchronous>, transform_indices = @transform_2, window_bounds = array<i64: 1, 128>}, {pipeline_mode = #tpu.pipeline_mode<synchronous>, transform_indices = @transform_3, window_bounds = array<i64: 128, 16>}, {pipeline_mode = #tpu.pipeline_mode<synchronous>, transform_indices = @transform_4, window_bounds = array<i64: 1, 16>}, {transform_indices = @transform_5, window_bounds = array<i64: 16, 16>}]} {
    %c0 = arith.constant 0 : index
    %c0_0 = arith.constant 0 : index
    %0 = vector.load %arg1[%c0, %c0_0] : memref<16x32xf32, #tpu.memory_space<vmem>>, vector<16x32xf32>
    %1 = arith.truncf %0 : vector<16x32xf32> to vector<16x32xbf16>
    %cst = arith.constant 0.000000e+00 : f32
    %2 = vector.broadcast %cst : f32 to vector<16x16xf32>
    %c0_1 = arith.constant 0 : index
    %c0_2 = arith.constant 0 : index
    %3 = vector.load %arg2[%c0_1, %c0_2] : memref<32x128xbf16, #tpu.memory_space<vmem>>, vector<32x128xbf16>
    %c0_3 = arith.constant 0 : index
    %c0_4 = arith.constant 0 : index
    %4 = vector.load %arg3[%c0_3, %c0_4] : memref<1x128xf32, #tpu.memory_space<vmem>>, vector<1x128xf32>
    %cst_5 = arith.constant dense<0.000000e+00> : vector<16x128xf32>
    %5 = tpu.matmul %1, %3, %cst_5 {dimension_numbers = #tpu.dot_dimension_numbers<[1], [0], [0], [1], [0, 0, 1, 1], [], []>} : vector<16x32xbf16>, vector<32x128xbf16>, vector<16x128xf32> -> vector<16x128xf32>
    %6 = vector.broadcast %4 : vector<1x128xf32> to vector<16x128xf32>
    %7 = arith.addf %5, %6 : vector<16x128xf32>
    %cst_6 = arith.constant 2.000000e+01 : f32
    %8 = vector.broadcast %cst_6 : f32 to vector<16x128xf32>
    %9 = arith.minimumf %7, %8 : vector<16x128xf32>
    %10 = math.exp %9 : vector<16x128xf32>
    %cst_7 = arith.constant 1.000000e+00 : f32
    %11 = vector.broadcast %cst_7 : f32 to vector<16x128xf32>
    %12 = arith.addf %11, %10 : vector<16x128xf32>
    %13 = arith.mulf %12, %12 : vector<16x128xf32>
    %cst_8 = arith.constant 1.000000e+00 : f32
    %14 = vector.broadcast %cst_8 : f32 to vector<16x128xf32>
    %15 = arith.subf %13, %14 : vector<16x128xf32>
    %cst_9 = arith.constant 1.000000e+00 : f32
    %16 = vector.broadcast %cst_9 : f32 to vector<16x128xf32>
    %17 = arith.addf %13, %16 : vector<16x128xf32>
    %18 = tpu.reciprocal %17 {approx = true} : vector<16x128xf32> -> vector<16x128xf32>
    %19 = arith.mulf %15, %18 : vector<16x128xf32>
    %20 = arith.mulf %7, %19 : vector<16x128xf32>
    %21 = arith.truncf %20 : vector<16x128xf32> to vector<16x128xbf16>
    %c0_10 = arith.constant 0 : index
    %c0_11 = arith.constant 0 : index
    %22 = vector.load %arg4[%c0_10, %c0_11] : memref<128x16xbf16, #tpu.memory_space<vmem>>, vector<128x16xbf16>
    %cst_12 = arith.constant dense<0.000000e+00> : vector<16x16xf32>
    %23 = tpu.matmul %21, %22, %cst_12 {dimension_numbers = #tpu.dot_dimension_numbers<[1], [0], [0], [1], [0, 0, 1, 1], [], []>} : vector<16x128xbf16>, vector<128x16xbf16>, vector<16x16xf32> -> vector<16x16xf32>
    %24 = arith.addf %2, %23 : vector<16x16xf32>
    %c0_13 = arith.constant 0 : index
    %c0_14 = arith.constant 0 : index
    %25 = vector.load %arg5[%c0_13, %c0_14] : memref<1x16xf32, #tpu.memory_space<vmem>>, vector<1x16xf32>
    %26 = vector.broadcast %25 : vector<1x16xf32> to vector<16x16xf32>
    %27 = arith.addf %24, %26 : vector<16x16xf32>
    %c0_15 = arith.constant 0 : index
    %c0_16 = arith.constant 0 : index
    %28 = vector.load %arg6[%c0_15, %c0_16] : memref<16x16xf32, #tpu.memory_space<vmem>>, vector<16x16xf32>
    tpu.vector_store %arg6[%c0_15, %c0_16], %27 {strides = array<i32>} : memref<16x16xf32, #tpu.memory_space<vmem>>, vector<16x16xf32>,
    return
  }
  func.func @transform_0(%arg0: i32) -> (i32, i32) {
    %c0_i32 = arith.constant 0 : i32
    %c0_i32_0 = arith.constant 0 : i32
    return %arg0, %c0_i32 : i32, i32
  }
  func.func @transform_1(%arg0: i32) -> (i32, i32) {
    %c0_i32 = arith.constant 0 : i32
    %c0_i32_0 = arith.constant 0 : i32
    %c0_i32_1 = arith.constant 0 : i32
    return %c0_i32, %c0_i32_0 : i32, i32
  }
  func.func @transform_2(%arg0: i32) -> (i32, i32) {
    %c0_i32 = arith.constant 0 : i32
    %c0_i32_0 = arith.constant 0 : i32
    %c0_i32_1 = arith.constant 0 : i32
    return %c0_i32, %c0_i32_0 : i32, i32
  }
  func.func @transform_3(%arg0: i32) -> (i32, i32) {
    %c0_i32 = arith.constant 0 : i32
    %c0_i32_0 = arith.constant 0 : i32
    %c0_i32_1 = arith.constant 0 : i32
    return %c0_i32, %c0_i32_0 : i32, i32
  }
  func.func @transform_4(%arg0: i32) -> (i32, i32) {
    %c0_i32 = arith.constant 0 : i32
    %c0_i32_0 = arith.constant 0 : i32
    %c0_i32_1 = arith.constant 0 : i32
    return %c0_i32, %c0_i32_0 : i32, i32
  }
  func.func @transform_5(%arg0: i32) -> (i32, i32) {
    %c0_i32 = arith.constant 0 : i32
    %c0_i32_0 = arith.constant 0 : i32
    return %arg0, %c0_i32 : i32, i32
  }
}

</mosaic_0001>

<llo_original>
// kernel: mlp_forward.1
$region0: #{mlp_forward.1}
  #allocation0 [shape = 'u32[]', space=smem, size = 0x4, offset = 0x4, fixed_abs, tag = 'smem constant byte address 0x4 - core index']
  #allocation1 [shape = 'u32[72,128]{1,0:T(1,128)}', space=vmem, size = 0x9000, scoped, tag = 'internal scratch']
  %s0 = inlined_call_operand.vmem [shape: f32[16,32], index: 0, kind: input, shape index: {}]
  %s1 = inlined_call_operand.vmem [shape: bf16[32,128], index: 1, kind: input, shape index: {}]
  %s2 = inlined_call_operand.vmem [shape: f32[1,128], index: 2, kind: input, shape index: {}]
  %s3 = inlined_call_operand.vmem [shape: bf16[128,16], index: 3, kind: input, shape index: {}]
  %s4 = inlined_call_operand.vmem [shape: f32[1,16], index: 4, kind: input, shape index: {}]
  %s5 = inlined_call_operand.hbm [shape: f32[16,16], index: 5, kind: output, shape index: {}]
  %s6 = sld [smem:[#allocation0]]
  $region30: #{mlp_forward.1} parent=0
    _
  %s8 = ssub.s32 1, %s6
  %s9 = scalar_select 0, %s8, %s6
  $region1: #{mlp_forward.1} parent=0
    #allocation2 [shape = 'u8[8192]{0}', space=vmem, size = 0x2000, scoped, tag = 'output window, operand 0, single buffered']
    #allocation3 [shape = 's32[1]{0}', space=sflag, size = 0x4, scoped, tag = 'scoped memory for mlp_forward.1']
    %10 = vsyncpa [#allocation3], 0
    // Predicated region
    $region2: #{mlp_forward.1} parent=1 // pred_check
      _
    $region3: #{mlp_forward.1} parent=1 // pred_check_branch
      %12 = sbr.rel (0) target = $region5
    $region4: #{mlp_forward.1} parent=1 // pred_region
      _
    $region5: #{mlp_forward.1} parent=1 // pred_fallthru
      _
    // Predicated region
    $region6: #{mlp_forward.1} parent=1 // pred_check
      _
    $region7: #{mlp_forward.1} parent=1 // pred_check_branch
      %14 = sbr.rel (0) target = $region9
    $region8: #{mlp_forward.1} parent=1 // pred_region
      _
    $region9: #{mlp_forward.1} parent=1 // pred_fallthru
      _
    // Predicated region
    $region10: #{mlp_forward.1} parent=1 // pred_check
      _
    $region11: #{mlp_forward.1} parent=1 // pred_check_branch
      %16 = sbr.rel (0) target = $region13
    $region12: #{mlp_forward.1} parent=1 // pred_region
      _
    $region13: #{mlp_forward.1} parent=1 // pred_fallthru
      _
    // Predicated region
    $region14: #{mlp_forward.1} parent=1 // pred_check
      _
    $region15: #{mlp_forward.1} parent=1 // pred_check_branch
      %18 = sbr.rel (0) target = $region17
    $region16: #{mlp_forward.1} parent=1 // pred_region
      _
    $region17: #{mlp_forward.1} parent=1 // pred_fallthru
      _
    // Predicated region
    $region18: #{mlp_forward.1} parent=1 // pred_check
      _
    $region19: #{mlp_forward.1} parent=1 // pred_check_branch
      %20 = sbr.rel (0) target = $region21
    $region20: #{mlp_forward.1} parent=1 // pred_region
      _
    $region21: #{mlp_forward.1} parent=1 // pred_fallthru
      _
    %v22 = vld [vmem:[%s0] sm:$0xff]
    %v23 = vld [vmem:[%s0 + $0x8] sm:$0xff]
    %v24 = vpack.c.bf16 %v23, %v22
    %v25 = vld [vmem:[%s1] sm:$0xf]
    %v26 = vld [vmem:[%s1 + $0x4] sm:$0xf]
    %v27 = vld [vmem:[%s1 + $0x8] sm:$0xf]
    %v28 = vld [vmem:[%s1 + $0xc] sm:$0xf]
    %v29 = vld [vmem:[%s2] sm:$0x1]
    %v31 = vperm.slane %v29, 0
    %v37 = vunpack.c.l.b16 %v25
    %v38 = vunpack.c.l.b16 %v26
    %v39 = vunpack.c.l.b16 %v27
    %v40 = vunpack.c.l.b16 %v28
    %v41 = vpack.c.b16 %v38, %v37
    %v42 = vpack.c.b16 %v40, %v39
    %vm45 = vcmask 261120
    %v47 = vsel %vm45, %v24, 0
    %49 = vmatpush.bf16.msra.mxu0 0
    %50 = vmatpush.bf16.msra.mxu0 0
    %51 = vmatpush.bf16.msra.mxu0 0
    %52 = vmatpush.bf16.msra.mxu0 0
    %53 = vmatpush.bf16.msra.mxu0 0
    %54 = vmatpush.bf16.msra.mxu0 0
    %55 = vmatpush.bf16.msra.mxu0 %v42
    %56 = vmatpush.bf16.msra.mxu0 %v41
    %57 = vmatmul.bf16.gmra.mxu0 %v47
    %v58 = vpop.f32.mrf.mxu0
    %v59 = vadd.f32 %v31, %v58
    %v60 = vpop.f32.mrf.mxu0
    %v61 = vadd.f32 %v31, %v60
    %62 = vdwg.mxu0
    %v63 = vmin.f32 %v59, 20.0
    %v64 = vmin.f32 %v61, 20.0
    %v65 = vmul.f32 %v63, 1.442695
    %v66 = vpow.pop %v65
    %v67 = vmul.f32 %v64, 1.442695
    %v68 = vpow.pop %v67
    %v69 = vadd.f32 %v66, 1.0
    %v70 = vadd.f32 %v68, 1.0
    %v71 = vmul.f32 %v69, %v69
    %v72 = vmul.f32 %v70, %v70
    %v73 = vsub.f32 %v71, 1.0
    %v74 = vsub.f32 %v72, 1.0
    %v75 = vadd.f32 %v71, 1.0
    %v76 = vadd.f32 %v72, 1.0
    %v77 = vrcp.pop %v75
    %v78 = vrcp.pop %v76
    %v79 = vmul.f32 %v73, %v77
    %v80 = vmul.f32 %v74, %v78
    %v81 = vmul.f32 %v59, %v79
    %v82 = vmul.f32 %v61, %v80
    %v83 = vpack.c.bf16 %v82, %v81
    %v84 = vld [vmem:[%s3] sm:$0xf]
    %v85 = vld [vmem:[%s3 + $0x4] sm:$0xf]
    %v86 = vld [vmem:[%s3 + $0x8] sm:$0xf]
    %v87 = vld [vmem:[%s3 + $0xc] sm:$0xf]
    %v88 = vld [vmem:[%s3 + $0x10] sm:$0xf]
    %v89 = vld [vmem:[%s3 + $0x14] sm:$0xf]
    %v90 = vld [vmem:[%s3 + $0x18] sm:$0xf]
    %v91 = vld [vmem:[%s3 + $0x1c] sm:$0xf]
    %v92 = vld [vmem:[%s3 + $0x20] sm:$0xf]
    %v93 = vld [vmem:[%s3 + $0x24] sm:$0xf]
    %v94 = vld [vmem:[%s3 + $0x28] sm:$0xf]
    %v95 = vld [vmem:[%s3 + $0x2c] sm:$0xf]
    %v96 = vld [vmem:[%s3 + $0x30] sm:$0xf]
    %v97 = vld [vmem:[%s3 + $0x34] sm:$0xf]
    %v98 = vld [vmem:[%s3 + $0x38] sm:$0xf]
    %v99 = vld [vmem:[%s3 + $0x3c] sm:$0xf]
    %v100 = vld [vmem:[%s4] sm:$0x1]
    %v102 = vperm.slane %v100, 0
    %v120 = vunpack.c.l.b16 %v84
    %v121 = vunpack.c.l.b16 %v85
    %v122 = vunpack.c.l.b16 %v86
    %v123 = vunpack.c.l.b16 %v87
    %v124 = vunpack.c.l.b16 %v88
    %v125 = vunpack.c.l.b16 %v89
    %v126 = vunpack.c.l.b16 %v90
    %v127 = vunpack.c.l.b16 %v91
    %v128 = vunpack.c.l.b16 %v92
    %v129 = vunpack.c.l.b16 %v93
    %v130 = vunpack.c.l.b16 %v94
    %v131 = vunpack.c.l.b16 %v95
    %v132 = vunpack.c.l.b16 %v96
    %v133 = vunpack.c.l.b16 %v97
    %v134 = vunpack.c.l.b16 %v98
    %v135 = vunpack.c.l.b16 %v99
    %v136 = vpack.c.b16 %v121, %v120
    %v137 = vpack.c.b16 %v123, %v122
    %v138 = vpack.c.b16 %v125, %v124
    %v139 = vpack.c.b16 %v127, %v126
    %v140 = vpack.c.b16 %v129, %v128
    %v141 = vpack.c.b16 %v131, %v130
    %v142 = vpack.c.b16 %v133, %v132
    %v143 = vpack.c.b16 %v135, %v134
    %152 = vmatpush.bf16.msra.mxu0 %v143
    %153 = vmatpush.bf16.msra.mxu0 %v142
    %154 = vmatpush.bf16.msra.mxu0 %v141
    %155 = vmatpush.bf16.msra.mxu0 %v140
    %156 = vmatpush.bf16.msra.mxu0 %v139
    %157 = vmatpush.bf16.msra.mxu0 %v138
    %158 = vmatpush.bf16.msra.mxu0 %v137
    %159 = vmatpush.bf16.msra.mxu0 %v136
    %160 = vmatmul.bf16.gmra.mxu0 %v83
    %v161 = vpop.f32.mrf.mxu0
    %v162 = vadd.f32 %v102, %v161
    %v163 = vpop.f32.mrf.mxu0
    %v164 = vadd.f32 %v102, %v163
    %165 = vdwg.mxu0
    %vm166 = vcmask 130048
    %167 = vst.msk [vmem:[#allocation2] sm:$0xff] %vm166, %v162
    %168 = vst.msk [vmem:[#allocation2 + $0x8] sm:$0xff] %vm166, %v164
    // Predicated region
    $region22: #{mlp_forward.1} parent=1 // pred_check
      _
    $region23: #{mlp_forward.1} parent=1 // pred_check_branch
      %170 = sbr.rel (0) target = $region25
    $region24: #{mlp_forward.1} parent=1 // pred_region
      %172 = vsyncadd [#allocation3], 0
      %s173 = sshll.u32 [#allocation2], 4
      %s174 = int_to_ptr.vmem [resolvable:$true] %s173
      %s175 = sshll.u32 %s5, 4
      %s176 = int_to_ptr.hbm [resolvable:$true] %s175
      %181 = dma.vmem_to_hbm [thread:$0]  %s174, 256, %s176, [#allocation3], 128, 128, 8
    $region25: #{mlp_forward.1} parent=1 // pred_fallthru
      _
    // Predicated region
    $region26: #{mlp_forward.1} parent=1 // pred_check
      _
    $region27: #{mlp_forward.1} parent=1 // pred_check_branch
      %183 = sbr.rel (0) target = $region29
    $region28: #{mlp_forward.1} parent=1 // pred_region
      %185 = dma.done [#allocation3], 256
    $region29: #{mlp_forward.1} parent=1 // pred_fallthru
      _
    %186 = vsyncpa [#allocation3], 1

</llo_original>
